<compile_context>
chip_gen: v5e
topology: v5e:2x2
jax: 0.10.0
libtpu: 0.0.40
codegen_flags: <defaults>
</compile_context>

<pallas_src>
import functools

import jax
import jax.numpy as jnp
from jax import lax
from jax.experimental import pallas as pl
from jax.experimental.pallas import tpu as pltpu


def _nt_xent_rowtile_kernel(z_ref, out_ref, m_sc, l_sc, *, tile_r, tile_c, n_col_tiles):
    """One grid step = one row tile: full online-logsumexp sweep over resident z."""
    neg_inf = jnp.float32(-jnp.inf)
    row0 = pl.multiple_of(pl.program_id(0) * tile_r, tile_r)

    # Row operand for this tile, sliced from the VMEM-resident z (no extra HBM stream).
    # 1/temperature is already folded into z as sqrt(1/T) on both operands.
    z_row = z_ref[pl.ds(row0, tile_r), :]                         # (tile_r, Dp)
    row_ids = row0 + lax.broadcasted_iota(jnp.int32, (tile_r, 1), 0)

    m_sc[...] = jnp.full((tile_r, 1), neg_inf, jnp.float32)
    l_sc[...] = jnp.zeros((tile_r, 1), jnp.float32)

    @pl.loop(0, n_col_tiles)
    def _(c):
        col0 = pl.multiple_of(c * tile_c, tile_c)
        z_col = z_ref[pl.ds(col0, tile_c), :]                     # (tile_c, Dp)

        # (tile_r, tile_c) similarity tile on the MXU, contracting feature dims directly
        # (no transposed copy of z). f32 operands -> accurate multi-pass MXU path.
        sim = lax.dot_general(z_row, z_col, (((1,), (1,)), ((), ())),
                              preferred_element_type=jnp.float32)

        # Exclude self-similarity (global row == global col). Compact (tile_r,1) vs
        # (1,tile_c) broadcast compare; only the diagonal band ever matches.
        # tile_c >= 2 always, so each masked row still has a finite max (no NaN alpha).
        col_ids = col0 + lax.broadcasted_iota(jnp.int32, (1, tile_c), 1)
        sim = jnp.where(row_ids == col_ids, neg_inf, sim)

        # Online (flash-style) logsumexp update over the column chunks.
        m_prev = m_sc[...]
        m_new = jnp.maximum(m_prev, jnp.max(sim, axis=1, keepdims=True))
        l_sc[...] = (l_sc[...] * jnp.exp(m_prev - m_new)
                     + jnp.sum(jnp.exp(sim - m_new), axis=1, keepdims=True))
        m_sc[...] = m_new

    # One partial sum per row tile (sublane reduce, XLU slot); the wrapper sums the
    # grid_r partials. Positives are handled entirely in the wrapper.
    lse = m_sc[...] + jnp.log(l_sc[...])                          # (tile_r, 1)
    out_ref[...] = jnp.sum(lse, axis=0, keepdims=True)            # (1, 1)


def _pick_tile(n, candidates):
    for c in candidates:
        if n % c == 0:
            return c
    # TODO(synk): for awkward N with no divisor among the candidates, pad N to a 256
    #             multiple (mask pad columns to -inf, drop pad rows) instead of falling
    #             back to a full-extent block.
    return n


def nt_xent_pallas(z_i, z_j, temperature, *, operand_dtype=jnp.float32):
    B, D = z_i.shape
    N = 2 * B
    inv_t = 1.0 / float(temperature)
    sqrt_inv_t = inv_t ** 0.5

    z_i = z_i.astype(jnp.float32)
    z_j = z_j.astype(jnp.float32)

    # F.normalize(p=2, dim=1): x / max(||x||, 1e-12) == x * rsqrt(max(||x||^2, 1e-24)).
    # Fold sqrt(1/T) into the same multiply so sim = (z*s)(z*s)^T carries the full 1/T
    # with zero extra kernel work and no second scaled copy of z.
    def l2norm_scaled(x):
        sq = jnp.sum(x * x, axis=1, keepdims=True)
        return x * (lax.rsqrt(jnp.maximum(sq, jnp.float32(1e-24)))
                    * jnp.float32(sqrt_inv_t))

    zi_s = l2norm_scaled(z_i)
    zj_s = l2norm_scaled(z_j)

    # Sum of positive logits: each of the B positive pairs appears twice in the loss.
    # sum_i pos_i = 2 * sum <zi_n, zj_n> / T  (the sqrt(1/T) on each operand gives 1/T).
    pos_sum = 2.0 * jnp.sum(zi_s * zj_s)

    z = jnp.concatenate([zi_s, zj_s], axis=0)                     # (N, D)

    # Pad the feature dim to a lane multiple with zeros (dot products / norms unchanged).
    d_pad = (-D) % 128
    if d_pad:
        z = jnp.pad(z, ((0, 0), (0, d_pad)))
    Dp = D + d_pad
    z = z.astype(operand_dtype)

    # Large tiles: 256-multiples preferred (v6e/v7x 2x256x256 MXUs); 128 fine for v5e.
    tile_r = _pick_tile(N, (512, 256, 128, 64, 32, 16, 8))
    tile_c = _pick_tile(N, (1024, 512, 256, 128, 64, 32, 16, 8))
    grid_r = N // tile_r
    n_col_tiles = N // tile_c

    # Explicit VMEM plan: resident z (double-buffered by the pipeline) + working set.
    elem = jnp.dtype(operand_dtype).itemsize
    z_bytes = N * Dp * elem
    work_bytes = 4 * tile_r * tile_c * 4 + tile_r * Dp * 4 + 8 * tile_r * 4
    vmem_est = 2 * z_bytes + work_bytes + (2 << 20)
    vmem_limit = None
    if vmem_est > (30 << 20):
        vmem_limit = int(min(vmem_est * 5 // 4, 100 << 20))

    kernel = functools.partial(_nt_xent_rowtile_kernel, tile_r=tile_r,
                               tile_c=tile_c, n_col_tiles=n_col_tiles)

    lse_partials = pl.pallas_call(
        kernel,
        out_shape=jax.ShapeDtypeStruct((grid_r, 1), jnp.float32),
        grid_spec=pltpu.PrefetchScalarGridSpec(
            num_scalar_prefetch=0,
            grid=(grid_r,),
            in_specs=[
                # Full z resident in VMEM: constant block index -> fetched from HBM once.
                pl.BlockSpec((N, Dp), lambda i: (0, 0)),
            ],
            out_specs=pl.BlockSpec((1, 1), lambda i: (i, 0)),
            scratch_shapes=[
                pltpu.VMEM((tile_r, 1), jnp.float32),   # running max
                pltpu.VMEM((tile_r, 1), jnp.float32),   # running sum of exp
            ],
        ),
        compiler_params=pltpu.CompilerParams(
            # Row tiles are independent -> parallel (megacore sharding on 2-TC chips).
            dimension_semantics=("parallel",),
            vmem_limit_bytes=vmem_limit,
        ),
    )(z)

    return (jnp.sum(lse_partials) - pos_sum) / jnp.float32(N)


def nt_xent_reference(z_i, z_j, temperature):
    """Pure-JAX reference mirroring the PyTorch module (sqrt+clamp normalize, full sim)."""
    def l2norm(x):
        nrm = jnp.sqrt(jnp.sum(x * x, axis=1, keepdims=True))
        return x / jnp.maximum(nrm, 1e-12)

    z_i = l2norm(z_i)
    z_j = l2norm(z_j)
    B = z_i.shape[0]
    N = 2 * B
    z = jnp.concatenate([z_i, z_j], axis=0)
    sim = (z @ z.T) / temperature
    pos = jnp.concatenate(
        [jnp.diagonal(sim, offset=B), jnp.diagonal(sim, offset=-B)], axis=0
    )
    sim_masked = jnp.where(jnp.eye(N, dtype=bool), -jnp.inf, sim)
    lse = jax.scipy.special.logsumexp(sim_masked, axis=1)
    return jnp.sum(lse - pos) / N


if __name__ == "__main__":
    key = jax.random.PRNGKey(0)
    k1, k2 = jax.random.split(key)
    B, D = 4, 32
    temperature = 0.5

    z_i = jax.random.normal(k1, (B, D), dtype=jnp.float32)
    z_j = jax.random.normal(k2, (B, D), dtype=jnp.float32)

    loss_fn = jax.jit(functools.partial(nt_xent_pallas, temperature=temperature))
    loss = jax.block_until_ready(loss_fn(z_i, z_j))
    ref = jax.block_until_ready(nt_xent_reference(z_i, z_j, temperature))

    assert jnp.allclose(loss, ref, rtol=1e-5, atol=1e-5), (loss, ref)
    print("KERNEL_OK")
</pallas_src>

<mosaic_0001>
module attributes {stable_mosaic.version = 11 : i64} {
  func.func @_nt_xent_rowtile_kernel(%arg0: i32, %arg1: memref<8x128xf32, #tpu.memory_space<vmem>>, %arg2: memref<1x1xf32, #tpu.memory_space<vmem>>, %arg3: memref<8x1xf32, #tpu.memory_space<vmem>>, %arg4: memref<8x1xf32, #tpu.memory_space<vmem>>) attributes {dimension_semantics = [#tpu.dimension_semantics<parallel>], iteration_bounds = array<i64: 1>, scalar_prefetch = 0 : i64, scratch_operands = 2 : i64, tpu.core_type = #tpu.core_type<tc>, window_params = [{pipeline_mode = #tpu.pipeline_mode<synchronous>, transform_indices = @transform_0, window_bounds = array<i64: 8, 128>}, {transform_indices = @transform_1, window_bounds = array<i64: 1, 1>}]} {
    %c8_i32 = arith.constant 8 : i32
    %0 = arith.muli %arg0, %c8_i32 : i32
    %1 = tpu.assume_multiple %0, 8 : i32
    %2 = arith.index_cast %1 : i32 to index
    %c0 = arith.constant 0 : index
    %3 = vector.load %arg1[%2, %c0] : memref<8x128xf32, #tpu.memory_space<vmem>>, vector<8x128xf32>
    %4 = tpu.iota {dimensions = array<i32: 0>} : vector<8x1xi32>
    %5 = vector.broadcast %1 : i32 to vector<8x1xi32>
    %6 = arith.addi %5, %4 : vector<8x1xi32>
    %cst = arith.constant 0xFF800000 : f32
    %7 = vector.broadcast %cst : f32 to vector<8x1xf32>
    %c0_0 = arith.constant 0 : index
    %c0_1 = arith.constant 0 : index
    %8 = vector.load %arg3[%c0_0, %c0_1] : memref<8x1xf32, #tpu.memory_space<vmem>>, vector<8x1xf32>
    tpu.vector_store %arg3[%c0_0, %c0_1], %7 {strides = array<i32>} : memref<8x1xf32, #tpu.memory_space<vmem>>, vector<8x1xf32>,
    %cst_2 = arith.constant 0.000000e+00 : f32
    %9 = vector.broadcast %cst_2 : f32 to vector<8x1xf32>
    %c0_3 = arith.constant 0 : index
    %c0_4 = arith.constant 0 : index
    %10 = vector.load %arg4[%c0_3, %c0_4] : memref<8x1xf32, #tpu.memory_space<vmem>>, vector<8x1xf32>
    tpu.vector_store %arg4[%c0_3, %c0_4], %9 {strides = array<i32>} : memref<8x1xf32, #tpu.memory_space<vmem>>, vector<8x1xf32>,
    %cst_5 = arith.constant 0xFF800000 : f32
    %c0_i32 = arith.constant 0 : i32
    %c1_i32 = arith.constant 1 : i32
    %11 = arith.muli %c0_i32, %c1_i32 : i32
    %c0_i32_6 = arith.constant 0 : i32
    %12 = arith.addi %c0_i32_6, %11 : i32
    %c8_i32_7 = arith.constant 8 : i32
    %13 = arith.muli %12, %c8_i32_7 : i32
    %14 = tpu.assume_multiple %13, 8 : i32
    %15 = arith.index_cast %14 : i32 to index
    %c0_8 = arith.constant 0 : index
    %16 = vector.load %arg1[%15, %c0_8] : memref<8x128xf32, #tpu.memory_space<vmem>>, vector<8x128xf32>
    %cst_9 = arith.constant dense<0.000000e+00> : vector<8x8xf32>
    %17 = tpu.matmul %3, %16, %cst_9 {dimension_numbers = #tpu.dot_dimension_numbers<[1], [1], [0], [0], [0, 0, 1, 0], [], []>} : vector<8x128xf32>, vector<8x128xf32>, vector<8x8xf32> -> vector<8x8xf32>
    %18 = tpu.iota {dimensions = array<i32: 1>} : vector<1x8xi32>
    %19 = vector.broadcast %14 : i32 to vector<1x8xi32>
    %20 = arith.addi %19, %18 : vector<1x8xi32>
    %21 = vector.broadcast %6 : vector<8x1xi32> to vector<8x8xi32>
    %22 = vector.broadcast %20 : vector<1x8xi32> to vector<8x8xi32>
    %23 = arith.cmpi eq, %21, %22 : vector<8x8xi32>
    %24 = vector.broadcast %cst_5 : f32 to vector<8x8xf32>
    %25 = arith.select %23, %24, %17 : vector<8x8xi1>, vector<8x8xf32>
    %c0_10 = arith.constant 0 : index
    %c0_11 = arith.constant 0 : index
    %26 = vector.load %arg3[%c0_10, %c0_11] : memref<8x1xf32, #tpu.memory_space<vmem>>, vector<8x1xf32>
    %cst_12 = arith.constant dense<0xFF800000> : vector<8xf32>
    %27 = vector.multi_reduction <maximumf>, %25, %cst_12 [1] : vector<8x8xf32> to vector<8xf32>
    %28 = vector.shape_cast %27 : vector<8xf32> to vector<8x1xf32>
    %29 = arith.maximumf %26, %28 : vector<8x1xf32>
    %c0_13 = arith.constant 0 : index
    %c0_14 = arith.constant 0 : index
    %30 = vector.load %arg4[%c0_13, %c0_14] : memref<8x1xf32, #tpu.memory_space<vmem>>, vector<8x1xf32>
    %31 = arith.subf %26, %29 : vector<8x1xf32>
    %32 = math.exp %31 : vector<8x1xf32>
    %33 = arith.mulf %30, %32 : vector<8x1xf32>
    %34 = vector.broadcast %29 : vector<8x1xf32> to vector<8x8xf32>
    %35 = arith.subf %25, %34 : vector<8x8xf32>
    %36 = math.exp %35 : vector<8x8xf32>
    %cst_15 = arith.constant dense<0.000000e+00> : vector<8xf32>
    %37 = vector.multi_reduction <add>, %36, %cst_15 [1] : vector<8x8xf32> to vector<8xf32>
    %38 = vector.shape_cast %37 : vector<8xf32> to vector<8x1xf32>
    %39 = arith.addf %33, %38 : vector<8x1xf32>
    %c0_16 = arith.constant 0 : index
    %c0_17 = arith.constant 0 : index
    %40 = vector.load %arg4[%c0_16, %c0_17] : memref<8x1xf32, #tpu.memory_space<vmem>>, vector<8x1xf32>
    tpu.vector_store %arg4[%c0_16, %c0_17], %39 {strides = array<i32>} : memref<8x1xf32, #tpu.memory_space<vmem>>, vector<8x1xf32>,
    %c0_18 = arith.constant 0 : index
    %c0_19 = arith.constant 0 : index
    %41 = vector.load %arg3[%c0_18, %c0_19] : memref<8x1xf32, #tpu.memory_space<vmem>>, vector<8x1xf32>
    tpu.vector_store %arg3[%c0_18, %c0_19], %29 {strides = array<i32>} : memref<8x1xf32, #tpu.memory_space<vmem>>, vector<8x1xf32>,
    %c1_i32_20 = arith.constant 1 : i32
    %c0_21 = arith.constant 0 : index
    %c0_22 = arith.constant 0 : index
    %42 = vector.load %arg3[%c0_21, %c0_22] : memref<8x1xf32, #tpu.memory_space<vmem>>, vector<8x1xf32>
    %c0_23 = arith.constant 0 : index
    %c0_24 = arith.constant 0 : index
    %43 = vector.load %arg4[%c0_23, %c0_24] : memref<8x1xf32, #tpu.memory_space<vmem>>, vector<8x1xf32>
    %44 = math.log %43 : vector<8x1xf32>
    %45 = arith.addf %42, %44 : vector<8x1xf32>
    %cst_25 = arith.constant dense<0.000000e+00> : vector<1xf32>
    %46 = vector.multi_reduction <add>, %45, %cst_25 [0] : vector<8x1xf32> to vector<1xf32>
    %47 = vector.shape_cast %46 : vector<1xf32> to vector<1x1xf32>
    %c0_26 = arith.constant 0 : index
    %c0_27 = arith.constant 0 : index
    %48 = vector.load %arg2[%c0_26, %c0_27] : memref<1x1xf32, #tpu.memory_space<vmem>>, vector<1x1xf32>
    tpu.vector_store %arg2[%c0_26, %c0_27], %47 {strides = array<i32>} : memref<1x1xf32, #tpu.memory_space<vmem>>, vector<1x1xf32>,
    return
  }
  func.func @transform_0(%arg0: i32) -> (i32, i32) {
    %c0_i32 = arith.constant 0 : i32
    %c0_i32_0 = arith.constant 0 : i32
    %c0_i32_1 = arith.constant 0 : i32
    return %c0_i32, %c0_i32_0 : i32, i32
  }
  func.func @transform_1(%arg0: i32) -> (i32, i32) {
    %c0_i32 = arith.constant 0 : i32
    %c0_i32_0 = arith.constant 0 : i32
    return %arg0, %c0_i32 : i32, i32
  }
}

</mosaic_0001>

<llo_original>
// kernel: nt_xent_pallas.1
$region0: #{nt_xent_pallas.1}
  #allocation0 [shape = 'u32[]', space=smem, size = 0x4, offset = 0x4, fixed_abs, tag = 'smem constant byte address 0x4 - core index']
  #allocation1 [shape = 'u32[72,128]{1,0:T(1,128)}', space=vmem, size = 0x9000, scoped, tag = 'internal scratch']
  #allocation2 [shape = 'f32[8,1]{1,0:T(8,128)}', space=vmem, size = 0x1000, scoped, tag = 'scratch operand']
  #allocation3 [shape = 'f32[8,1]{1,0:T(8,128)}', space=vmem, size = 0x1000, scoped, tag = 'scratch operand']
  %s0 = inlined_call_operand.vmem [shape: f32[8,128], index: 0, kind: input, shape index: {}]
  %s1 = inlined_call_operand.hbm [shape: f32[1,1], index: 1, kind: output, shape index: {}]
  %s2 = sld [smem:[#allocation0]]
  $region14: #{nt_xent_pallas.1} parent=0
    _
  %s4 = ssub.s32 1, %s2
  %s5 = scalar_select 0, %s4, %s2
  $region1: #{nt_xent_pallas.1} parent=0
    #allocation4 [shape = 'u8[512]{0}', space=vmem, size = 0x400, scoped, tag = 'output window, operand 0, single buffered']
    #allocation5 [shape = 's32[1]{0}', space=sflag, size = 0x4, scoped, tag = 'scoped memory for nt_xent_pallas.1']
    %6 = vsyncpa [#allocation5], 0
    // Predicated region
    $region2: #{nt_xent_pallas.1} parent=1 // pred_check
      _
    $region3: #{nt_xent_pallas.1} parent=1 // pred_check_branch
      %8 = sbr.rel (0) target = $region5
    $region4: #{nt_xent_pallas.1} parent=1 // pred_region
      _
    $region5: #{nt_xent_pallas.1} parent=1 // pred_fallthru
      _
    %s9 = smul.u32 0, 8
    %s10 = scalar_lea.vmem %s0, %s9
    %v11 = vld [vmem:[%s10] sm:$0xff]
    %v12 = vlaneseq
    %v13 = vshrl.u32 %v12, 7
    %v14 = vstv %s9
    %v15 = vadd.s32 %v14, %v13
    %vm16 = vcmask 7168
    %17 = vst.msk [vmem:[#allocation2] sm:$0xff] %vm16, -inf
    %18 = vst.msk [vmem:[#allocation3] sm:$0xff] %vm16, 0.0
    %v19 = vld [vmem:[%s0] sm:$0xff]
    %20 = vmatpush.xpose.msra.mxu0 0.0
    %21 = vmatpush.xpose.msra.mxu0 0.0
    %22 = vmatpush.xpose.msra.mxu0 0.0
    %23 = vmatpush.xpose.msra.mxu0 0.0
    %24 = vmatpush.xpose.msra.mxu0 0.0
    %25 = vmatpush.xpose.msra.mxu0 0.0
    %26 = vmatpush.xpose.msra.mxu0 0.0
    %27 = vmatpush.xpose.msra.mxu0 0.0
    %28 = vmatpush.xpose.msra.mxu0 0.0
    %29 = vmatpush.xpose.msra.mxu0 0.0
    %30 = vmatpush.xpose.msra.mxu0 0.0
    %31 = vmatpush.xpose.msra.mxu0 0.0
    %32 = vmatpush.xpose.msra.mxu0 0.0
    %33 = vmatpush.xpose.msra.mxu0 0.0
    %34 = vmatpush.xpose.msra.mxu0 0.0
    %35 = vmatpush.xpose.msra.mxu0 %v19
    %36 = vmatmul.f32.gmra.mxu0 %v11
    %v37 = vpop.f32.mrf.mxu0
    %v38 = vadd.f32 0.0, %v37
    %39 = vdwg.mxu0
    %v40 = vlaneseq
    %v41 = vand.u32 %v40, 127
    %v42 = vstv 0
    %v43 = vadd.s32 %v42, %v41
    %vm44 = vcmp.eq.s32.totalorder %v15, %v43
    %v45 = vsel %vm44, -inf, %v38
    %v46 = vld [vmem:[#allocation2] sm:$0xff]
    %vm47 = vcmask 64512
    %v48 = vsel %vm47, %v45, -inf
    %49 = vmax.xlane.f32.xlu0 %v48
    %v50 = vpop.xlane.xlu0 %49
    %v51 = vmax.f32 %v46, %v50
    %v52 = vld [vmem:[#allocation3] sm:$0xff]
    %v53 = vsub.f32 %v46, %v51
    %v54 = vmul.f32 %v53, 1.442695
    %v55 = vpow.pop %v54
    %v56 = vmul.f32 %v52, %v55
    %58 = vset.pattern.permute.xlu0 0
    %59 = vperm.xlu0 %58, %v51
    %v60 = vpop.permute.xlu0 %59
    %v62 = vsub.f32 %v45, %v60
    %v63 = vmul.f32 %v62, 1.442695
    %v64 = vpow.pop %v63
    %v65 = vsel %vm47, %v64, 0.0
    %66 = vadd.xlane.f32.xlu0 %v65
    %v67 = vpop.xlane.xlu0 %66
    %v68 = vadd.f32 %v56, %v67
    %69 = vst.msk [vmem:[#allocation3] sm:$0xff] %vm16, %v68
    %70 = vst.msk [vmem:[#allocation2] sm:$0xff] %vm16, %v51
    %v71 = vld [vmem:[#allocation2] sm:$0xff]
    %v72 = vld [vmem:[#allocation3] sm:$0xff]
    %v73 = vlog2.pop %v72
    %v74 = vmul.f32 %v73, 0.6931472
    %v75 = vadd.f32 %v71, %v74
    %v76 = vsel %vm16, %v75, 0.0
    %v77 = vrot.slane %v76, 4
    %v78 = vadd.f32 %v76, %v77
    %v79 = vrot.slane %v78, 2
    %v80 = vadd.f32 %v78, %v79
    %v81 = vrot.slane %v80, 1
    %v82 = vadd.f32 %v80, %v81
    %vm83 = vcmask 0
    %84 = vst.msk [vmem:[#allocation4] sm:$0x1] %vm83, %v82
    // Predicated region
    $region6: #{nt_xent_pallas.1} parent=1 // pred_check
      _
    $region7: #{nt_xent_pallas.1} parent=1 // pred_check_branch
      %86 = sbr.rel (0) target = $region9
    $region8: #{nt_xent_pallas.1} parent=1 // pred_region
      %88 = vsyncadd [#allocation5], 0
      %s90 = sshll.u32 [#allocation4], 4
      %s91 = int_to_ptr.vmem [resolvable:$true] %s90
      %s92 = sshll.u32 %s1, 4
      %s93 = int_to_ptr.hbm [resolvable:$true] %s92
      %95 = dma.vmem_to_hbm [thread:$0]  %s91, 16, %s93, [#allocation5]
    $region9: #{nt_xent_pallas.1} parent=1 // pred_fallthru
      _
    // Predicated region
    $region10: #{nt_xent_pallas.1} parent=1 // pred_check
      _
    $region11: #{nt_xent_pallas.1} parent=1 // pred_check_branch
      %97 = sbr.rel (0) target = $region13
    $region12: #{nt_xent_pallas.1} parent=1 // pred_region
      %99 = dma.done [#allocation5], 16
    $region13: #{nt_xent_pallas.1} parent=1 // pred_fallthru
      _
    %100 = vsyncpa [#allocation5], 1

</llo_original>
